<compile_context>
chip_gen: v6e
topology: v6e:2x2x1
jax: 0.10.0
libtpu: 0.0.40
codegen_flags: <defaults>
</compile_context>

<pallas_src>
import math

import jax
import jax.numpy as jnp
from jax.experimental import pallas as pl
from jax.experimental.pallas import tpu as pltpu


_SLAB_CAP_BYTES = 2 << 20       # max per-column scale slab kept VMEM-resident
_BLOCK_BUDGET_BYTES = 6 << 20   # target padded bytes per x block
_VMEM_LIMIT_FLOOR = 32 << 20
_VMEM_LIMIT_CEIL = 56 << 20     # stay under v7x's 64 MiB physical VMEM


# ---------------------------------------------------------------------------
# Small host-side helpers (tile / fold selection)
# ---------------------------------------------------------------------------
def _sublane_pack(itemsize):
    # Native sublane packing: 8 rows for 32-bit, 16 for 16-bit, 32 for 8-bit.
    return {1: 32, 2: 16, 4: 8}.get(itemsize, 8)


def _round_up(n, m):
    return -(-n // m) * m


def _divisors(n):
    ds = set()
    i = 1
    while i * i <= n:
        if n % i == 0:
            ds.add(i)
            ds.add(n // i)
        i += 1
    return sorted(ds)


def _choose_row_tile(rows, cols, itemsize, budget):
    """Largest legal divisor row-tile whose padded block stays under budget.

    Prefers (a) leaving >= 2 grid steps so both v7x TensorCores get work, and
    (b) dtype-native sublane multiples (8/f32, 16/bf16, 32/int8).
    Legality: tile is a multiple of 8 or equals the full row count.
    """
    sub = _sublane_pack(itemsize)
    cols_p = _round_up(cols, 128)

    def padded_bytes(rt):
        return _round_up(rt, sub) * cols_p * itemsize

    legal = [d for d in _divisors(rows) if d % 8 == 0 or d == rows]
    fitting = [d for d in legal if padded_bytes(d) <= budget]
    if not fitting:
        fitting = [min(legal)]

    def score(d):
        return ((rows // d) >= 2, d % sub == 0, d)

    return max(fitting, key=score)


def _choose_fold(rows, cols, itemsize, max_width_bytes=256 << 10):
    """Fold factor k (divisor of rows) so k*cols is lane-dense (128-multiple)."""
    sub = _sublane_pack(itemsize)
    best, best_score = 1, None
    for k in _divisors(rows):
        width = k * cols
        if width * itemsize > max_width_bytes:
            break
        score = ((width % 128) == 0, (rows // k) >= sub, width >= 512,
                 (rows // k) >= 2, -k)
        if best_score is None or score > best_score:
            best, best_score = k, score
    return best


# ---------------------------------------------------------------------------
# Kernel + generic tiled broadcast-multiply
# ---------------------------------------------------------------------------
def _bcast_mul_kernel(x_ref, s_ref, o_ref):
    # s block is (1, P) (per-column slab) or (rt, 1) (per-row scale);
    # jnp broadcasting covers both.  Pure VPU work with huge slot slack.
    o_ref[...] = x_ref[...] * s_ref[...]


def _broadcast_mul(x2, s2, *, budget=_BLOCK_BUDGET_BYTES):
    """y2 = x2 * s2 where x2 is (R, P) and s2 is (1, P) or (R, 1)."""
    R, P = x2.shape
    itemsize = x2.dtype.itemsize
    sub = _sublane_pack(itemsize)

    rt = _choose_row_tile(R, P, itemsize, budget)
    grid = (R // rt,)

    per_col = (s2.shape[0] == 1)
    if per_col:
        s_block = (1, P)
        s_map = lambda i: (0, 0)   # constant index -> fetched once, VMEM-resident
    else:
        s_block = (rt, 1)
        s_map = lambda i: (i, 0)   # tiny per-row scale block

    # Explicit VMEM limit: double-buffered in+out blocks + scale + headroom.
    cols_p = _round_up(P, 128)
    x_blk = _round_up(rt, sub) * cols_p * itemsize
    s_blk = _round_up(s_block[0], sub) * _round_up(s_block[1], 128) * itemsize
    vmem_limit = int(min(max(4 * x_blk + 2 * s_blk + (4 << 20),
                             _VMEM_LIMIT_FLOOR), _VMEM_LIMIT_CEIL))

    return pl.pallas_call(
        _bcast_mul_kernel,
        out_shape=jax.ShapeDtypeStruct((R, P), x2.dtype),
        grid_spec=pltpu.PrefetchScalarGridSpec(
            num_scalar_prefetch=0,
            grid=grid,
            in_specs=[
                pl.BlockSpec((rt, P), lambda i: (i, 0)),
                pl.BlockSpec(s_block, s_map),
            ],
            out_specs=pl.BlockSpec((rt, P), lambda i: (i, 0)),
        ),
        compiler_params=pltpu.CompilerParams(
            dimension_semantics=("parallel",),
            vmem_limit_bytes=vmem_limit),
    )(x2, s2)


# ---------------------------------------------------------------------------
# Public wrappers matching Scale.forward
# ---------------------------------------------------------------------------
def scale_nchw(x, scale, *, slab_cap_bytes=_SLAB_CAP_BYTES):
    """y = x * scale.view(C, 1, 1) for x of shape (N, C, H, W)."""
    N, C, H, W = x.shape
    HW = H * W
    P = C * HW
    sdt = scale.astype(x.dtype)

    if P * x.dtype.itemsize <= slab_cap_bytes:
        # Slab path: lane-varying (1, C*HW) scale, batch rows -> large
        # lane-dense blocks, no masked HW tails, scale DMA'd exactly once.
        x2 = x.reshape(N, P)
        slab = jnp.broadcast_to(sdt[:, None], (C, HW)).reshape(1, P)
        y2 = _broadcast_mul(x2, slab)
    else:
        # Fallback: per-row scale over (N*C, HW) when one image's slab would
        # be too large to keep VMEM-resident.
        x2 = x.reshape(N * C, HW)
        srows = jnp.tile(sdt, N).reshape(N * C, 1)
        y2 = _broadcast_mul(x2, srows)
    return y2.reshape(N, C, H, W)


def scale_channels_last(x, scale):
    """y = x * scale for x of shape (..., C)."""
    C = x.shape[-1]
    R = math.prod(x.shape[:-1]) if x.ndim > 1 else 1
    sdt = scale.astype(x.dtype)

    # Fold k rows into lanes so the lane width is a 128-multiple even for
    # small C -> unmasked full-width stores, fewer grid steps.
    k = _choose_fold(R, C, x.dtype.itemsize)
    x2 = x.reshape(R // k, k * C)
    slab = jnp.tile(sdt, k).reshape(1, k * C)
    y2 = _broadcast_mul(x2, slab)
    return y2.reshape(x.shape)


# ---------------------------------------------------------------------------
# Self-test
# ---------------------------------------------------------------------------
if __name__ == "__main__":
    key = jax.random.PRNGKey(0)
    k1, k2, k3, k4, k5, k6 = jax.random.split(key, 6)

    # --- use_nchw=True: y = x * scale.view(C, 1, 1) -------------------------
    N, C, H, W = 2, 4, 16, 16
    x = jax.random.normal(k1, (N, C, H, W), jnp.float32)
    scale = 1.0 + 0.1 * jax.random.normal(k2, (C,), jnp.float32)
    y = jax.block_until_ready(scale_nchw(x, scale))
    ref = x * scale[None, :, None, None]
    assert y.shape == x.shape
    assert jnp.allclose(y, ref, rtol=1e-6, atol=1e-6), "NCHW mismatch"

    # --- use_nchw=True with non-128-multiple spatial (7x7); both code paths -
    x3 = jax.random.normal(k3, (2, 8, 7, 7), jnp.float32)
    s3 = 1.0 + 0.1 * jax.random.normal(k4, (8,), jnp.float32)
    ref3 = x3 * s3[None, :, None, None]
    y3a = jax.block_until_ready(scale_nchw(x3, s3))                     # slab path
    y3b = jax.block_until_ready(scale_nchw(x3, s3, slab_cap_bytes=0))   # row path
    assert jnp.allclose(y3a, ref3, rtol=1e-6, atol=1e-6), "NCHW slab-path mismatch"
    assert jnp.allclose(y3b, ref3, rtol=1e-6, atol=1e-6), "NCHW row-path mismatch"

    # --- use_nchw=False: y = x * scale (channels-last, small C) -------------
    x_cl = jax.random.normal(k5, (2, 16, 16, 4), jnp.float32)
    s_cl = 1.0 + 0.1 * jax.random.normal(k6, (4,), jnp.float32)
    y_cl = jax.block_until_ready(scale_channels_last(x_cl, s_cl))
    ref_cl = x_cl * s_cl
    assert y_cl.shape == x_cl.shape
    assert jnp.allclose(y_cl, ref_cl, rtol=1e-6, atol=1e-6), "channels-last mismatch"

    # --- channels-last bf16 (exercises 16-row sublane packing) --------------
    x_bf = jax.random.normal(k5, (2, 7, 7, 96), jnp.float32).astype(jnp.bfloat16)
    s_bf = 1.0 + 0.1 * jax.random.normal(k6, (96,), jnp.float32)
    y_bf = jax.block_until_ready(scale_channels_last(x_bf, s_bf))
    ref_bf = x_bf * s_bf.astype(jnp.bfloat16)
    assert jnp.allclose(y_bf.astype(jnp.float32), ref_bf.astype(jnp.float32),
                        rtol=1e-2, atol=1e-2), "channels-last bf16 mismatch"

    print("KERNEL_OK")
</pallas_src>

<mosaic_0001>
module attributes {stable_mosaic.version = 11 : i64} {
  func.func @_bcast_mul_kernel(%arg0: i32, %arg1: memref<2x1024xf32, #tpu.memory_space<vmem>>, %arg2: memref<1x1024xf32, #tpu.memory_space<vmem>>, %arg3: memref<2x1024xf32, #tpu.memory_space<vmem>>) attributes {dimension_semantics = [#tpu.dimension_semantics<parallel>], iteration_bounds = array<i64: 1>, scalar_prefetch = 0 : i64, scratch_operands = 0 : i64, tpu.core_type = #tpu.core_type<tc>, window_params = [{transform_indices = @transform_0, window_bounds = array<i64: 2, 1024>}, {pipeline_mode = #tpu.pipeline_mode<synchronous>, transform_indices = @transform_1, window_bounds = array<i64: 1, 1024>}, {transform_indices = @transform_2, window_bounds = array<i64: 2, 1024>}]} {
    %c0 = arith.constant 0 : index
    %c0_0 = arith.constant 0 : index
    %0 = vector.load %arg1[%c0, %c0_0] : memref<2x1024xf32, #tpu.memory_space<vmem>>, vector<2x1024xf32>
    %c0_1 = arith.constant 0 : index
    %c0_2 = arith.constant 0 : index
    %1 = vector.load %arg2[%c0_1, %c0_2] : memref<1x1024xf32, #tpu.memory_space<vmem>>, vector<1x1024xf32>
    %2 = vector.broadcast %1 : vector<1x1024xf32> to vector<2x1024xf32>
    %3 = arith.mulf %0, %2 : vector<2x1024xf32>
    %c0_3 = arith.constant 0 : index
    %c0_4 = arith.constant 0 : index
    %4 = vector.load %arg3[%c0_3, %c0_4] : memref<2x1024xf32, #tpu.memory_space<vmem>>, vector<2x1024xf32>
    tpu.vector_store %arg3[%c0_3, %c0_4], %3 {strides = array<i32>} : memref<2x1024xf32, #tpu.memory_space<vmem>>, vector<2x1024xf32>,
    return
  }
  func.func @transform_0(%arg0: i32) -> (i32, i32) {
    %c0_i32 = arith.constant 0 : i32
    %c0_i32_0 = arith.constant 0 : i32
    return %arg0, %c0_i32 : i32, i32
  }
  func.func @transform_1(%arg0: i32) -> (i32, i32) {
    %c0_i32 = arith.constant 0 : i32
    %c0_i32_0 = arith.constant 0 : i32
    %c0_i32_1 = arith.constant 0 : i32
    return %c0_i32, %c0_i32_0 : i32, i32
  }
  func.func @transform_2(%arg0: i32) -> (i32, i32) {
    %c0_i32 = arith.constant 0 : i32
    %c0_i32_0 = arith.constant 0 : i32
    return %arg0, %c0_i32 : i32, i32
  }
}

</mosaic_0001>

<llo_original>
// kernel: tpu_custom_call.1
$region0: #{tpu_custom_call.1}
  #allocation0 [shape = 'u32[]', space=smem, size = 0x4, offset = 0x4, fixed_abs, tag = 'smem constant byte address 0x4 - core index']
  #allocation1 [shape = 'u32[144,128]{1,0:T(1,128)}', space=vmem, size = 0x12000, scoped, tag = 'internal scratch']
  %s0 = inlined_call_operand.hbm [shape: f32[2,1024], index: 0, kind: input, shape index: {}]
  %s1 = inlined_call_operand.hbm [shape: f32[1,1024], index: 1, kind: input, shape index: {}]
  %s2 = inlined_call_operand.hbm [shape: f32[2,1024], index: 2, kind: output, shape index: {}]
  %s3 = sld [smem:[#allocation0]]
  $region26: #{tpu_custom_call.1} parent=0
    _
  %s5 = ssub.s32 1, %s3
  %s6 = scalar_select 0, %s5, %s3
  $region1: #{tpu_custom_call.1} parent=0
    #allocation2 [shape = 'u8[8192]{0}', space=vmem, size = 0x2000, scoped, tag = 'input window, operand 0, single buffered']
    #allocation3 [shape = 's32[1]{0}', space=sflag, size = 0x4, scoped, tag = 'scoped memory for tpu_custom_call.1']
    #allocation4 [shape = 's32[1]{0}', space=sflag, size = 0x4, scoped, tag = 'scoped memory for tpu_custom_call.1']
    #allocation5 [shape = 'u8[4096]{0}', space=vmem, size = 0x1000, scoped, tag = 'input window, operand 1, single buffered']
    #allocation6 [shape = 's32[1]{0}', space=sflag, size = 0x4, scoped, tag = 'scoped memory for tpu_custom_call.1']
    #allocation7 [shape = 'u8[8192]{0}', space=vmem, size = 0x2000, scoped, tag = 'output window, operand 0, single buffered']
    %7 = vsyncpa [#allocation3], 0
    %8 = vsyncpa [#allocation6], 0
    %9 = vsyncpa [#allocation4], 0
    // Predicated region
    $region2: #{tpu_custom_call.1} parent=1 // pred_check
      _
    $region3: #{tpu_custom_call.1} parent=1 // pred_check_branch
      %11 = sbr.rel (0) target = $region5
    $region4: #{tpu_custom_call.1} parent=1 // pred_region
      %s13 = ssub.s32 256, 256
      %14 = vsyncadd [#allocation3], %s13
      %s16 = sshll.u32 [#allocation2], 4
      %s17 = int_to_ptr.vmem [resolvable:$true] %s16
      %19 = dma.hbm_to_vmem [thread:$0]  %s0, 256, %s17, [#allocation3]
    $region5: #{tpu_custom_call.1} parent=1 // pred_fallthru
      _
    // Predicated region
    $region6: #{tpu_custom_call.1} parent=1 // pred_check
      _
    $region7: #{tpu_custom_call.1} parent=1 // pred_check_branch
      %21 = sbr.rel (0) target = $region9
    $region8: #{tpu_custom_call.1} parent=1 // pred_region
      %s23 = ssub.s32 128, 128
      %24 = vsyncadd [#allocation6], %s23
      %s26 = sshll.u32 [#allocation5], 4
      %s27 = int_to_ptr.vmem [resolvable:$true] %s26
      %29 = dma.hbm_to_vmem [thread:$0]  %s1, 128, %s27, [#allocation6]
    $region9: #{tpu_custom_call.1} parent=1 // pred_fallthru
      _
    // Predicated region
    $region10: #{tpu_custom_call.1} parent=1 // pred_check
      _
    $region11: #{tpu_custom_call.1} parent=1 // pred_check_branch
      %31 = sbr.rel (0) target = $region13
    $region12: #{tpu_custom_call.1} parent=1 // pred_region
      %32 = dma.done [#allocation3], 256
    $region13: #{tpu_custom_call.1} parent=1 // pred_fallthru
      _
    // Predicated region
    $region14: #{tpu_custom_call.1} parent=1 // pred_check
      _
    $region15: #{tpu_custom_call.1} parent=1 // pred_check_branch
      %34 = sbr.rel (0) target = $region17
    $region16: #{tpu_custom_call.1} parent=1 // pred_region
      %35 = dma.done [#allocation6], 128
    $region17: #{tpu_custom_call.1} parent=1 // pred_fallthru
      _
    %v36 = vld [vmem:[#allocation2] sm:$0xff]
    %v37 = vld [vmem:[#allocation2 + $0x8] sm:$0xff]
    %v38 = vld [vmem:[#allocation5] sm:$0xff]
    %v40 = vlaneseq
    %v41 = vshrl.u32 %v40, 7
    %v42 = vsub.s32 0, %v41
    %v43 = vrot.slane %v38, %v42
    %v44 = vlaneseq
    %v45 = vshrl.u32 %v44, 7
    %v46 = vsub.s32 1, %v45
    %v47 = vrot.slane %v38, %v46
    %v48 = vlaneseq
    %v49 = vshrl.u32 %v48, 7
    %v50 = vsub.s32 2, %v49
    %v51 = vrot.slane %v38, %v50
    %v52 = vlaneseq
    %v53 = vshrl.u32 %v52, 7
    %v54 = vsub.s32 3, %v53
    %v55 = vrot.slane %v38, %v54
    %v56 = vlaneseq
    %v57 = vshrl.u32 %v56, 7
    %v58 = vsub.s32 4, %v57
    %v59 = vrot.slane %v38, %v58
    %v60 = vlaneseq
    %v61 = vshrl.u32 %v60, 7
    %v62 = vsub.s32 5, %v61
    %v63 = vrot.slane %v38, %v62
    %v64 = vlaneseq
    %v65 = vshrl.u32 %v64, 7
    %v66 = vsub.s32 6, %v65
    %v67 = vrot.slane %v38, %v66
    %v68 = vlaneseq
    %v69 = vshrl.u32 %v68, 7
    %v70 = vsub.s32 7, %v69
    %v71 = vrot.slane %v38, %v70
    %v72 = vcombine.low %v43, %v47
    %v73 = vcombine.low %v51, %v55
    %v75 = vunpack.c.l.s4 1983009808
    %v76 = vunpack.c.0.s8 %v75
    %v77 = vlaneseq
    %v78 = vshrl.u32 %v77, 7
    %v79 = vsub.s32 %v76, %v78
    %v80 = vrot.slane %v72, %v79
    %v82 = vunpack.c.l.s4 1983009808
    %v83 = vunpack.c.0.s8 %v82
    %v84 = vlaneseq
    %v85 = vshrl.u32 %v84, 7
    %v86 = vsub.s32 %v83, %v85
    %v87 = vrot.slane %v73, %v86
    %v88 = vcombine.low %v80, %v87
    %v89 = vcombine.low %v59, %v63
    %v90 = vcombine.low %v67, %v71
    %v92 = vunpack.c.l.s4 1983009808
    %v93 = vunpack.c.0.s8 %v92
    %v94 = vlaneseq
    %v95 = vshrl.u32 %v94, 7
    %v96 = vsub.s32 %v93, %v95
    %v97 = vrot.slane %v89, %v96
    %v99 = vunpack.c.l.s4 1983009808
    %v100 = vunpack.c.0.s8 %v99
    %v101 = vlaneseq
    %v102 = vshrl.u32 %v101, 7
    %v103 = vsub.s32 %v100, %v102
    %v104 = vrot.slane %v90, %v103
    %v105 = vcombine.low %v97, %v104
    %v108 = vmul.f32 %v36, %v88
    %v109 = vmul.f32 %v37, %v105
    %110 = vst [vmem:[#allocation7] sm:$0xff] %v108
    %111 = vst [vmem:[#allocation7 + $0x8] sm:$0xff] %v109
    // Predicated region
    $region18: #{tpu_custom_call.1} parent=1 // pred_check
      _
    $region19: #{tpu_custom_call.1} parent=1 // pred_check_branch
      %113 = sbr.rel (0) target = $region21
    $region20: #{tpu_custom_call.1} parent=1 // pred_region
      %s115 = ssub.s32 256, 256
      %116 = vsyncadd [#allocation4], %s115
      %s118 = sshll.u32 [#allocation7], 4
      %s119 = int_to_ptr.vmem [resolvable:$true] %s118
      %121 = dma.vmem_to_hbm [thread:$0]  %s119, 256, %s2, [#allocation4]
    $region21: #{tpu_custom_call.1} parent=1 // pred_fallthru
      _
    // Predicated region
    $region22: #{tpu_custom_call.1} parent=1 // pred_check
      _
    $region23: #{tpu_custom_call.1} parent=1 // pred_check_branch
      %123 = sbr.rel (0) target = $region25
    $region24: #{tpu_custom_call.1} parent=1 // pred_region
      %124 = dma.done [#allocation4], 256
    $region25: #{tpu_custom_call.1} parent=1 // pred_fallthru
      _
    %125 = vsyncpa [#allocation3], 1
    %126 = vsyncpa [#allocation6], 1
    %127 = vsyncpa [#allocation4], 1

</llo_original>
